<compile_context>
chip_gen: v6e
topology: v6e:2x2x1
jax: 0.10.0
libtpu: 0.0.40
codegen_flags: <defaults>
</compile_context>

<pallas_src>
import math
import functools

import jax
import jax.numpy as jnp
from jax.experimental import pallas as pl
from jax.experimental.pallas import tpu as pltpu


def _global_pointer_kernel(x_ref, w_ref, b_ref, *rest,
                           head_size, heads_per_step,
                           apply_rope, have_tril, have_mask):
    """One (batch, head-group) step.

    x_ref   : (1, S, H)         bf16  activation block (re-fetched only when batch changes)
    w_ref   : (G, H, HP*2D)     bf16  ALL head-group weights, VMEM resident (constant index_map)
    b_ref   : (G, 1, HP*2D)     f32   biases (q side pre-scaled by 1/sqrt(D)), VMEM resident
    cos_ref : (heads, 1, D/2)   f32   RoPE tables, VMEM resident             [if apply_rope]
    sin_ref : (heads, 1, D/2)   f32                                          [if apply_rope]
    tril_ref: (S, S)            f32   additive strict-lower-tri bias slab    [if have_tril]
    arow_ref: (1, S, 1)         f32   additive 0/-inf padding mask rows      [if have_mask]
    acol_ref: (1, 1, S)         f32   additive 0/-inf padding mask cols      [if have_mask]
    out_ref : (1, HP, S, S)
    """
    idx = 0
    if apply_rope:
        cos_ref, sin_ref = rest[idx], rest[idx + 1]
        idx += 2
    if have_tril:
        tril_ref = rest[idx]
        idx += 1
    if have_mask:
        arow_ref, acol_ref = rest[idx], rest[idx + 1]
        idx += 2
    out_ref = rest[idx]

    D, HP = head_size, heads_per_step
    D2 = D // 2
    g = pl.program_id(1)                       # head-group index

    x = x_ref[0]                               # (S, H) bf16
    w = w_ref[g]                               # (H, HP*2D) bf16 -- VMEM-resident, no HBM re-read
    # Fused projection for all HP heads of the group (wide N keeps the MXU fed).
    y = jnp.dot(x, w, preferred_element_type=jnp.float32) + b_ref[g]   # (S, HP*2D) f32

    if have_tril:
        tril = tril_ref[...]                   # (S, S)
    if have_mask:
        arow = arow_ref[0]                     # (S, 1)
        acol = acol_ref[0]                     # (1, S)

    for p in range(HP):                        # static unroll over heads in the group
        base = p * 2 * D
        if apply_rope:
            cs = cos_ref[g * HP + p]           # (1, D2), broadcast over S in the FMAs
            sn = sin_ref[g * HP + p]
            q_e, q_o = y[:, base:base + D2], y[:, base + D2:base + D]
            k_e, k_o = y[:, base + D:base + D + D2], y[:, base + D + D2:base + 2 * D]
            # RoPE in even/odd-permuted space: out_e = v_e*cos - v_o*sin ; out_o = v_o*cos + v_e*sin
            rq = jnp.concatenate([q_e * cs - q_o * sn, q_o * cs + q_e * sn], axis=-1)
            rk = jnp.concatenate([k_e * cs - k_o * sn, k_o * cs + k_e * sn], axis=-1)
        else:
            rq = y[:, base:base + D]
            rk = y[:, base + D:base + 2 * D]

        # logits[m, n] = sum_d rq[m, d] * rk[n, d]  -- single K=D contraction, bf16 in / f32 acc.
        logits = jax.lax.dot_general(
            rq.astype(jnp.bfloat16), rk.astype(jnp.bfloat16),
            (((1,), (1,)), ((), ())), preferred_element_type=jnp.float32)

        # Epilogue: pure adds.  1/sqrt(D) is already folded into the q-side weights,
        # the tril slab is pre-scaled, padding masks are additive 0/-inf.
        if have_tril:
            logits = logits + tril
        if have_mask:
            logits = logits + arow + acol

        out_ref[0, p] = logits.astype(out_ref.dtype)


def global_pointer_forward(x, weight, bias, *, heads, head_size,
                           mask=None, rope=True, tril_mask=True, max_len=512,
                           out_dtype=None):
    """GlobalPointer forward.

    x:      (B, S, H) float32 (cast to bf16 for the MXU internally)
    weight: (heads*head_size*2, H)  -- PyTorch nn.Linear layout
    bias:   (heads*head_size*2,) or None
    mask:   optional (B, S) 0/1 padding mask
    returns (B, heads, S, S) in `out_dtype` (default: x.dtype; pass jnp.bfloat16 to
            halve the dominant (B,heads,S,S) writeback if downstream accepts it)
    """
    B, S, H = x.shape
    D = head_size
    D2 = D // 2
    assert D % 2 == 0, "head_size must be even for RoPE"
    O = heads * 2 * D
    assert weight.shape == (O, H)
    assert heads <= max_len
    out_dtype = x.dtype if out_dtype is None else out_dtype
    inv_scale = 1.0 / math.sqrt(D)

    # Two heads per grid step when possible: projection N = HP*2D fills the 256-wide
    # MXU on v6e/v7x and halves the per-step (~0.35us) grid overhead.
    HP = 2 if heads % 2 == 0 else 1
    G = heads // HP

    def split_even_odd(a):          # reorder last dim: even indices, then odd indices
        return jnp.concatenate([a[..., 0::2], a[..., 1::2]], axis=-1)

    # ---- weights: PyTorch (O, H) -> (G, H, HP*2D) slabs, per head [q | k],
    #      even/odd-permuted d, 1/sqrt(D) folded into the q side, bf16 for the MXU ----
    wt = jnp.transpose(weight).reshape(H, heads, 2, D)                # [:, h, 0]=q, [:, h, 1]=k
    wq = split_even_odd(jnp.transpose(wt[:, :, 0, :], (1, 0, 2))) * inv_scale   # (heads, H, D)
    wk = split_even_odd(jnp.transpose(wt[:, :, 1, :], (1, 0, 2)))               # (heads, H, D)
    w_head = jnp.concatenate([wq, wk], axis=-1)                       # (heads, H, 2D)
    w_pack = jnp.transpose(w_head.reshape(G, HP, H, 2 * D),
                           (0, 2, 1, 3)).reshape(G, H, HP * 2 * D).astype(jnp.bfloat16)

    if bias is None:
        b_pack = jnp.zeros((G, 1, HP * 2 * D), dtype=jnp.float32)
    else:
        b2 = bias.astype(jnp.float32).reshape(heads, 2, D)
        b_head = jnp.concatenate([split_even_odd(b2[:, 0, :]) * inv_scale,
                                  split_even_odd(b2[:, 1, :])], axis=-1)        # (heads, 2D)
        b_pack = b_head.reshape(G, 1, HP * 2 * D)

    inputs = [x.astype(jnp.bfloat16), w_pack, b_pack]
    in_specs = [
        pl.BlockSpec((1, S, H), lambda b, g: (b, 0, 0)),               # x: fetched once per batch
        pl.BlockSpec((G, H, HP * 2 * D), lambda b, g: (0, 0, 0)),      # weights: VMEM resident
        pl.BlockSpec((G, 1, HP * 2 * D), lambda b, g: (0, 0, 0)),      # bias: VMEM resident
    ]

    # ---- RoPE tables (literal bert4torch semantics: position index == head index) ----
    if rope:
        div = jnp.exp(jnp.arange(0, D, 2, dtype=jnp.float32) * (-math.log(10000.0) / D))  # (D2,)
        ang = jnp.arange(heads, dtype=jnp.float32)[:, None] * div[None, :]                # (heads, D2)
        cos_t = jnp.cos(ang).reshape(heads, 1, D2).astype(jnp.float32)
        sin_t = jnp.sin(ang).reshape(heads, 1, D2).astype(jnp.float32)
        inputs += [cos_t, sin_t]
        in_specs += [pl.BlockSpec((heads, 1, D2), lambda b, g: (0, 0, 0))] * 2

    # ---- additive strict-lower-triangular bias (pre-scaled), built once, VMEM resident ----
    if tril_mask:
        r = jax.lax.broadcasted_iota(jnp.int32, (S, S), 0)
        c = jax.lax.broadcasted_iota(jnp.int32, (S, S), 1)
        tril_bias = jnp.where(r > c, jnp.float32(-1e12 * inv_scale), jnp.float32(0.0))
        inputs += [tril_bias]
        in_specs += [pl.BlockSpec((S, S), lambda b, g: (0, 0))]

    # ---- additive padding masks (0 / -inf); skipped entirely when mask is None ----
    have_mask = mask is not None
    if have_mask:
        keep = mask.astype(bool)
        add = jnp.where(keep, 0.0, -jnp.inf).astype(jnp.float32)       # (B, S)
        inputs += [add.reshape(B, S, 1), add.reshape(B, 1, S)]
        in_specs += [pl.BlockSpec((1, S, 1), lambda b, g: (b, 0, 0)),
                     pl.BlockSpec((1, 1, S), lambda b, g: (b, 0, 0))]

    kernel = functools.partial(_global_pointer_kernel,
                               head_size=D, heads_per_step=HP,
                               apply_rope=bool(rope),
                               have_tril=bool(tril_mask), have_mask=have_mask)

    out_itemsize = jnp.dtype(out_dtype).itemsize
    flops = B * heads * (4 * S * H * D + 2 * S * S * D)
    bytes_accessed = (B * S * H * 2 + G * H * HP * 2 * D * 2
                      + B * heads * S * S * out_itemsize + S * S * 4)

    # VMEM budget: double-buffered x & out blocks + resident weight/bias/RoPE/tril slabs,
    # with ~50% headroom for f32 intermediates (y, logits).  Capped below v7x's 64 MiB.
    vmem_est = int(1.5 * (2 * S * H * 2
                          + 2 * HP * S * S * out_itemsize
                          + 2 * G * H * HP * 2 * D * 2
                          + 2 * S * S * 4
                          + 3 * S * max(HP * 2 * D, S) * 4))
    vmem_limit = max(32 * 1024 * 1024, min(vmem_est, 56 * 1024 * 1024))
    # TODO(synk): for very long sequences (S >= ~1024 on v7x's 64 MiB VMEM) additionally
    # tile the query axis of the (S, S) output instead of emitting one full slab per head.

    return pl.pallas_call(
        kernel,
        out_shape=jax.ShapeDtypeStruct((B, heads, S, S), out_dtype),
        grid_spec=pltpu.PrefetchScalarGridSpec(
            num_scalar_prefetch=0,
            # head-group is the fastest grid axis: x's block index is constant across it,
            # so the activation tile is DMA'd once per batch, not once per head group.
            grid=(B, G),
            in_specs=in_specs,
            out_specs=pl.BlockSpec((1, HP, S, S), lambda b, g: (b, g, 0, 0)),
        ),
        compiler_params=pltpu.CompilerParams(
            dimension_semantics=("parallel", "parallel"),   # independent steps; v7x 2-TC split
            vmem_limit_bytes=vmem_limit),
        cost_estimate=pl.CostEstimate(flops=flops, transcendentals=0,
                                      bytes_accessed=bytes_accessed),
    )(*inputs)


def _global_pointer_reference(x, weight, bias, *, heads, head_size,
                              mask=None, rope=True, tril_mask=True, max_len=512):
    """Literal pure-JAX port of the PyTorch GlobalPointer forward (the spec)."""
    B, S, H = x.shape
    D = head_size
    hi = jax.lax.Precision.HIGHEST
    seq = jnp.einsum('bsh,oh->bso', x, weight, precision=hi)
    if bias is not None:
        seq = seq + bias
    seq = seq.reshape(B, S, heads, 2 * D)       # == stack(chunk(., heads, -1), dim=-2)
    qw, kw = seq[..., :D], seq[..., D:]
    if rope:
        pos = jnp.arange(max_len, dtype=jnp.float32)[:, None]
        div = jnp.exp(jnp.arange(0, D, 2, dtype=jnp.float32) * (-math.log(10000.0) / D))
        # table[:, ::2]=sin, [:, 1::2]=cos; repeat_interleave(2); slice with the literal
        # default seq_dim=-2 => first `heads` positions.
        cos_pos = jnp.repeat(jnp.cos(pos * div), 2, axis=-1)[:heads]   # (heads, D)
        sin_pos = jnp.repeat(jnp.sin(pos * div), 2, axis=-1)[:heads]

        def rot(v):
            v2 = jnp.stack([-v[..., 1::2], v[..., 0::2]], axis=-1).reshape(v.shape)
            return v * cos_pos + v2 * sin_pos

        qw, kw = rot(qw), rot(kw)
    logits = jnp.einsum('bmhd,bnhd->bhmn', qw, kw, precision=hi)
    if mask is not None:
        mb = mask.astype(bool)
        logits = jnp.where(mb[:, None, :, None], logits, -jnp.inf)
        logits = jnp.where(mb[:, None, None, :], logits, -jnp.inf)
    if tril_mask:
        tril = jnp.tril(jnp.ones((S, S), dtype=logits.dtype), -1)
        logits = logits - tril * 1e12
    return logits / (D ** 0.5)


if __name__ == "__main__":
    key = jax.random.PRNGKey(0)
    B, S, H = 2, 8, 32              # batch=2, seq=8, hidden=32
    heads, head_size = 2, 16        # dense out = heads*head_size*2 = 64
    kx, kw_, kb = jax.random.split(key, 3)
    x = jax.random.normal(kx, (B, S, H), dtype=jnp.float32)
    weight = 0.1 * jax.random.normal(kw_, (heads * head_size * 2, H), dtype=jnp.float32)
    bias = 0.1 * jax.random.normal(kb, (heads * head_size * 2,), dtype=jnp.float32)
    # padding mask: batch 1 has its last two positions padded out
    mask = jnp.ones((B, S), dtype=jnp.float32).at[1, 6:].set(0.0)

    out = global_pointer_forward(x, weight, bias, heads=heads, head_size=head_size,
                                 mask=mask, rope=True, tril_mask=True, max_len=512)
    out = jax.block_until_ready(out)

    ref = _global_pointer_reference(x, weight, bias, heads=heads, head_size=head_size,
                                    mask=mask, rope=True, tril_mask=True, max_len=512)

    assert out.shape == (B, heads, S, S)
    assert out.dtype == x.dtype
    # bf16 MXU inputs (f32 accumulation) -> slightly looser tolerance than pure f32.
    assert bool(jnp.allclose(out, ref, rtol=3e-2, atol=3e-2)), "kernel does not match reference"
    print("KERNEL_OK")
</pallas_src>

<mosaic_0001>
module attributes {stable_mosaic.version = 11 : i64} {
  func.func @_global_pointer_kernel(%arg0: i32, %arg1: i32, %arg2: memref<1x8x32xbf16, #tpu.memory_space<vmem>>, %arg3: memref<1x32x64xbf16, #tpu.memory_space<vmem>>, %arg4: memref<1x1x64xf32, #tpu.memory_space<vmem>>, %arg5: memref<2x1x8xf32, #tpu.memory_space<vmem>>, %arg6: memref<2x1x8xf32, #tpu.memory_space<vmem>>, %arg7: memref<8x8xf32, #tpu.memory_space<vmem>>, %arg8: memref<1x8x1xf32, #tpu.memory_space<vmem>>, %arg9: memref<1x1x8xf32, #tpu.memory_space<vmem>>, %arg10: memref<1x2x8x8xf32, #tpu.memory_space<vmem>>) attributes {dimension_semantics = [#tpu.dimension_semantics<parallel>, #tpu.dimension_semantics<parallel>], iteration_bounds = array<i64: 2, 1>, scalar_prefetch = 0 : i64, scratch_operands = 0 : i64, tpu.core_type = #tpu.core_type<tc>, window_params = [{transform_indices = @transform_0, window_bounds = array<i64: 1, 8, 32>}, {pipeline_mode = #tpu.pipeline_mode<synchronous>, transform_indices = @transform_1, window_bounds = array<i64: 1, 32, 64>}, {pipeline_mode = #tpu.pipeline_mode<synchronous>, transform_indices = @transform_2, window_bounds = array<i64: 1, 1, 64>}, {pipeline_mode = #tpu.pipeline_mode<synchronous>, transform_indices = @transform_3, window_bounds = array<i64: 2, 1, 8>}, {pipeline_mode = #tpu.pipeline_mode<synchronous>, transform_indices = @transform_4, window_bounds = array<i64: 2, 1, 8>}, {pipeline_mode = #tpu.pipeline_mode<synchronous>, transform_indices = @transform_5, window_bounds = array<i64: 8, 8>}, {transform_indices = @transform_6, window_bounds = array<i64: 1, 8, 1>}, {transform_indices = @transform_7, window_bounds = array<i64: 1, 1, 8>}, {transform_indices = @transform_8, window_bounds = array<i64: 1, 2, 8, 8>}]} {
    %c0 = arith.constant 0 : index
    %c0_0 = arith.constant 0 : index
    %c0_1 = arith.constant 0 : index
    %0 = vector.load %arg2[%c0, %c0_0, %c0_1] : memref<1x8x32xbf16, #tpu.memory_space<vmem>>, vector<1x8x32xbf16>
    %1 = vector.shape_cast %0 : vector<1x8x32xbf16> to vector<8x32xbf16>
    %2 = arith.index_cast %arg1 : i32 to index
    %c0_2 = arith.constant 0 : index
    %c0_3 = arith.constant 0 : index
    %3 = vector.load %arg3[%2, %c0_2, %c0_3] : memref<1x32x64xbf16, #tpu.memory_space<vmem>>, vector<1x32x64xbf16>
    %4 = vector.shape_cast %3 : vector<1x32x64xbf16> to vector<32x64xbf16>
    %cst = arith.constant dense<0.000000e+00> : vector<8x64xf32>
    %5 = tpu.matmul %1, %4, %cst {dimension_numbers = #tpu.dot_dimension_numbers<[1], [0], [0], [1], [0, 0, 1, 1], [], []>} : vector<8x32xbf16>, vector<32x64xbf16>, vector<8x64xf32> -> vector<8x64xf32>
    %6 = arith.index_cast %arg1 : i32 to index
    %c0_4 = arith.constant 0 : index
    %c0_5 = arith.constant 0 : index
    %7 = vector.load %arg4[%6, %c0_4, %c0_5] : memref<1x1x64xf32, #tpu.memory_space<vmem>>, vector<1x1x64xf32>
    %8 = vector.shape_cast %7 : vector<1x1x64xf32> to vector<1x64xf32>
    %9 = vector.broadcast %8 : vector<1x64xf32> to vector<8x64xf32>
    %10 = arith.addf %5, %9 : vector<8x64xf32>
    %c0_6 = arith.constant 0 : index
    %c0_7 = arith.constant 0 : index
    %11 = vector.load %arg7[%c0_6, %c0_7] : memref<8x8xf32, #tpu.memory_space<vmem>>, vector<8x8xf32>
    %c0_8 = arith.constant 0 : index
    %c0_9 = arith.constant 0 : index
    %c0_10 = arith.constant 0 : index
    %12 = vector.load %arg8[%c0_8, %c0_9, %c0_10] : memref<1x8x1xf32, #tpu.memory_space<vmem>>, vector<1x8x1xf32>
    %13 = vector.shape_cast %12 : vector<1x8x1xf32> to vector<8x1xf32>
    %c0_11 = arith.constant 0 : index
    %c0_12 = arith.constant 0 : index
    %c0_13 = arith.constant 0 : index
    %14 = vector.load %arg9[%c0_11, %c0_12, %c0_13] : memref<1x1x8xf32, #tpu.memory_space<vmem>>, vector<1x1x8xf32>
    %15 = vector.shape_cast %14 : vector<1x1x8xf32> to vector<1x8xf32>
    %c2_i32 = arith.constant 2 : i32
    %16 = arith.muli %arg1, %c2_i32 : i32
    %c0_i32 = arith.constant 0 : i32
    %17 = arith.addi %16, %c0_i32 : i32
    %18 = arith.index_cast %17 : i32 to index
    %c0_14 = arith.constant 0 : index
    %c0_15 = arith.constant 0 : index
    %19 = vector.load %arg5[%18, %c0_14, %c0_15] : memref<2x1x8xf32, #tpu.memory_space<vmem>>, vector<1x1x8xf32>
    %20 = vector.shape_cast %19 : vector<1x1x8xf32> to vector<1x8xf32>
    %c2_i32_16 = arith.constant 2 : i32
    %21 = arith.muli %arg1, %c2_i32_16 : i32
    %c0_i32_17 = arith.constant 0 : i32
    %22 = arith.addi %21, %c0_i32_17 : i32
    %23 = arith.index_cast %22 : i32 to index
    %c0_18 = arith.constant 0 : index
    %c0_19 = arith.constant 0 : index
    %24 = vector.load %arg6[%23, %c0_18, %c0_19] : memref<2x1x8xf32, #tpu.memory_space<vmem>>, vector<1x1x8xf32>
    %25 = vector.shape_cast %24 : vector<1x1x8xf32> to vector<1x8xf32>
    %26 = vector.extract_strided_slice %10 {offsets = [0, 0], sizes = [8, 8], strides = [1, 1]} : vector<8x64xf32> to vector<8x8xf32>
    %27 = vector.extract_strided_slice %10 {offsets = [0, 8], sizes = [8, 8], strides = [1, 1]} : vector<8x64xf32> to vector<8x8xf32>
    %28 = vector.extract_strided_slice %10 {offsets = [0, 16], sizes = [8, 8], strides = [1, 1]} : vector<8x64xf32> to vector<8x8xf32>
    %29 = vector.extract_strided_slice %10 {offsets = [0, 24], sizes = [8, 8], strides = [1, 1]} : vector<8x64xf32> to vector<8x8xf32>
    %30 = vector.broadcast %20 : vector<1x8xf32> to vector<8x8xf32>
    %31 = arith.mulf %26, %30 : vector<8x8xf32>
    %32 = vector.broadcast %25 : vector<1x8xf32> to vector<8x8xf32>
    %33 = arith.mulf %27, %32 : vector<8x8xf32>
    %34 = arith.subf %31, %33 : vector<8x8xf32>
    %35 = vector.broadcast %20 : vector<1x8xf32> to vector<8x8xf32>
    %36 = arith.mulf %27, %35 : vector<8x8xf32>
    %37 = vector.broadcast %25 : vector<1x8xf32> to vector<8x8xf32>
    %38 = arith.mulf %26, %37 : vector<8x8xf32>
    %39 = arith.addf %36, %38 : vector<8x8xf32>
    %40 = tpu.concatenate %34, %39 in 1 : vector<8x8xf32>, vector<8x8xf32> -> vector<8x16xf32>
    %41 = vector.broadcast %20 : vector<1x8xf32> to vector<8x8xf32>
    %42 = arith.mulf %28, %41 : vector<8x8xf32>
    %43 = vector.broadcast %25 : vector<1x8xf32> to vector<8x8xf32>
    %44 = arith.mulf %29, %43 : vector<8x8xf32>
    %45 = arith.subf %42, %44 : vector<8x8xf32>
    %46 = vector.broadcast %20 : vector<1x8xf32> to vector<8x8xf32>
    %47 = arith.mulf %29, %46 : vector<8x8xf32>
    %48 = vector.broadcast %25 : vector<1x8xf32> to vector<8x8xf32>
    %49 = arith.mulf %28, %48 : vector<8x8xf32>
    %50 = arith.addf %47, %49 : vector<8x8xf32>
    %51 = tpu.concatenate %45, %50 in 1 : vector<8x8xf32>, vector<8x8xf32> -> vector<8x16xf32>
    %52 = arith.truncf %40 : vector<8x16xf32> to vector<8x16xbf16>
    %53 = arith.truncf %51 : vector<8x16xf32> to vector<8x16xbf16>
    %cst_20 = arith.constant dense<0.000000e+00> : vector<8x8xf32>
    %54 = tpu.matmul %52, %53, %cst_20 {dimension_numbers = #tpu.dot_dimension_numbers<[1], [1], [0], [0], [0, 0, 1, 0], [], []>} : vector<8x16xbf16>, vector<8x16xbf16>, vector<8x8xf32> -> vector<8x8xf32>
    %55 = arith.addf %54, %11 : vector<8x8xf32>
    %56 = vector.broadcast %13 : vector<8x1xf32> to vector<8x8xf32>
    %57 = arith.addf %55, %56 : vector<8x8xf32>
    %58 = vector.broadcast %15 : vector<1x8xf32> to vector<8x8xf32>
    %59 = arith.addf %57, %58 : vector<8x8xf32>
    %c0_21 = arith.constant 0 : index
    %c0_22 = arith.constant 0 : index
    %c0_23 = arith.constant 0 : index
    %c0_24 = arith.constant 0 : index
    %60 = vector.load %arg10[%c0_21, %c0_22, %c0_23, %c0_24] : memref<1x2x8x8xf32, #tpu.memory_space<vmem>>, vector<1x1x8x8xf32>
    %61 = vector.shape_cast %60 : vector<1x1x8x8xf32> to vector<8x8xf32>
    %62 = vector.shape_cast %59 : vector<8x8xf32> to vector<1x1x8x8xf32>
    tpu.vector_store %arg10[%c0_21, %c0_22, %c0_23, %c0_24], %62 {strides = array<i32>} : memref<1x2x8x8xf32, #tpu.memory_space<vmem>>, vector<1x1x8x8xf32>,
    %c2_i32_25 = arith.constant 2 : i32
    %63 = arith.muli %arg1, %c2_i32_25 : i32
    %c1_i32 = arith.constant 1 : i32
    %64 = arith.addi %63, %c1_i32 : i32
    %65 = arith.index_cast %64 : i32 to index
    %c0_26 = arith.constant 0 : index
    %c0_27 = arith.constant 0 : index
    %66 = vector.load %arg5[%65, %c0_26, %c0_27] : memref<2x1x8xf32, #tpu.memory_space<vmem>>, vector<1x1x8xf32>
    %67 = vector.shape_cast %66 : vector<1x1x8xf32> to vector<1x8xf32>
    %c2_i32_28 = arith.constant 2 : i32
    %68 = arith.muli %arg1, %c2_i32_28 : i32
    %c1_i32_29 = arith.constant 1 : i32
    %69 = arith.addi %68, %c1_i32_29 : i32
    %70 = arith.index_cast %69 : i32 to index
    %c0_30 = arith.constant 0 : index
    %c0_31 = arith.constant 0 : index
    %71 = vector.load %arg6[%70, %c0_30, %c0_31] : memref<2x1x8xf32, #tpu.memory_space<vmem>>, vector<1x1x8xf32>
    %72 = vector.shape_cast %71 : vector<1x1x8xf32> to vector<1x8xf32>
    %73 = vector.extract_strided_slice %10 {offsets = [0, 32], sizes = [8, 8], strides = [1, 1]} : vector<8x64xf32> to vector<8x8xf32>
    %74 = vector.extract_strided_slice %10 {offsets = [0, 40], sizes = [8, 8], strides = [1, 1]} : vector<8x64xf32> to vector<8x8xf32>
    %75 = vector.extract_strided_slice %10 {offsets = [0, 48], sizes = [8, 8], strides = [1, 1]} : vector<8x64xf32> to vector<8x8xf32>
    %76 = vector.extract_strided_slice %10 {offsets = [0, 56], sizes = [8, 8], strides = [1, 1]} : vector<8x64xf32> to vector<8x8xf32>
    %77 = vector.broadcast %67 : vector<1x8xf32> to vector<8x8xf32>
    %78 = arith.mulf %73, %77 : vector<8x8xf32>
    %79 = vector.broadcast %72 : vector<1x8xf32> to vector<8x8xf32>
    %80 = arith.mulf %74, %79 : vector<8x8xf32>
    %81 = arith.subf %78, %80 : vector<8x8xf32>
    %82 = vector.broadcast %67 : vector<1x8xf32> to vector<8x8xf32>
    %83 = arith.mulf %74, %82 : vector<8x8xf32>
    %84 = vector.broadcast %72 : vector<1x8xf32> to vector<8x8xf32>
    %85 = arith.mulf %73, %84 : vector<8x8xf32>
    %86 = arith.addf %83, %85 : vector<8x8xf32>
    %87 = tpu.concatenate %81, %86 in 1 : vector<8x8xf32>, vector<8x8xf32> -> vector<8x16xf32>
    %88 = vector.broadcast %67 : vector<1x8xf32> to vector<8x8xf32>
    %89 = arith.mulf %75, %88 : vector<8x8xf32>
    %90 = vector.broadcast %72 : vector<1x8xf32> to vector<8x8xf32>
    %91 = arith.mulf %76, %90 : vector<8x8xf32>
    %92 = arith.subf %89, %91 : vector<8x8xf32>
    %93 = vector.broadcast %67 : vector<1x8xf32> to vector<8x8xf32>
    %94 = arith.mulf %76, %93 : vector<8x8xf32>
    %95 = vector.broadcast %72 : vector<1x8xf32> to vector<8x8xf32>
    %96 = arith.mulf %75, %95 : vector<8x8xf32>
    %97 = arith.addf %94, %96 : vector<8x8xf32>
    %98 = tpu.concatenate %92, %97 in 1 : vector<8x8xf32>, vector<8x8xf32> -> vector<8x16xf32>
    %99 = arith.truncf %87 : vector<8x16xf32> to vector<8x16xbf16>
    %100 = arith.truncf %98 : vector<8x16xf32> to vector<8x16xbf16>
    %cst_32 = arith.constant dense<0.000000e+00> : vector<8x8xf32>
    %101 = tpu.matmul %99, %100, %cst_32 {dimension_numbers = #tpu.dot_dimension_numbers<[1], [1], [0], [0], [0, 0, 1, 0], [], []>} : vector<8x16xbf16>, vector<8x16xbf16>, vector<8x8xf32> -> vector<8x8xf32>
    %102 = arith.addf %101, %11 : vector<8x8xf32>
    %103 = vector.broadcast %13 : vector<8x1xf32> to vector<8x8xf32>
    %104 = arith.addf %102, %103 : vector<8x8xf32>
    %105 = vector.broadcast %15 : vector<1x8xf32> to vector<8x8xf32>
    %106 = arith.addf %104, %105 : vector<8x8xf32>
    %c0_33 = arith.constant 0 : index
    %c1 = arith.constant 1 : index
    %c0_34 = arith.constant 0 : index
    %c0_35 = arith.constant 0 : index
    %107 = vector.load %arg10[%c0_33, %c1, %c0_34, %c0_35] : memref<1x2x8x8xf32, #tpu.memory_space<vmem>>, vector<1x1x8x8xf32>
    %108 = vector.shape_cast %107 : vector<1x1x8x8xf32> to vector<8x8xf32>
    %109 = vector.shape_cast %106 : vector<8x8xf32> to vector<1x1x8x8xf32>
    tpu.vector_store %arg10[%c0_33, %c1, %c0_34, %c0_35], %109 {strides = array<i32>} : memref<1x2x8x8xf32, #tpu.memory_space<vmem>>, vector<1x1x8x8xf32>,
    return
  }
  func.func @transform_0(%arg0: i32, %arg1: i32) -> (i32, i32, i32) {
    %c0_i32 = arith.constant 0 : i32
    %c0_i32_0 = arith.constant 0 : i32
    %c0_i32_1 = arith.constant 0 : i32
    return %arg0, %c0_i32, %c0_i32_0 : i32, i32, i32
  }
  func.func @transform_1(%arg0: i32, %arg1: i32) -> (i32, i32, i32) {
    %c0_i32 = arith.constant 0 : i32
    %c0_i32_0 = arith.constant 0 : i32
    %c0_i32_1 = arith.constant 0 : i32
    %c0_i32_2 = arith.constant 0 : i32
    return %c0_i32, %c0_i32_0, %c0_i32_1 : i32, i32, i32
  }
  func.func @transform_2(%arg0: i32, %arg1: i32) -> (i32, i32, i32) {
    %c0_i32 = arith.constant 0 : i32
    %c0_i32_0 = arith.constant 0 : i32
    %c0_i32_1 = arith.constant 0 : i32
    %c0_i32_2 = arith.constant 0 : i32
    return %c0_i32, %c0_i32_0, %c0_i32_1 : i32, i32, i32
  }
  func.func @transform_3(%arg0: i32, %arg1: i32) -> (i32, i32, i32) {
    %c0_i32 = arith.constant 0 : i32
    %c0_i32_0 = arith.constant 0 : i32
    %c0_i32_1 = arith.constant 0 : i32
    %c0_i32_2 = arith.constant 0 : i32
    return %c0_i32, %c0_i32_0, %c0_i32_1 : i32, i32, i32
  }
  func.func @transform_4(%arg0: i32, %arg1: i32) -> (i32, i32, i32) {
    %c0_i32 = arith.constant 0 : i32
    %c0_i32_0 = arith.constant 0 : i32
    %c0_i32_1 = arith.constant 0 : i32
    %c0_i32_2 = arith.constant 0 : i32
    return %c0_i32, %c0_i32_0, %c0_i32_1 : i32, i32, i32
  }
  func.func @transform_5(%arg0: i32, %arg1: i32) -> (i32, i32) {
    %c0_i32 = arith.constant 0 : i32
    %c0_i32_0 = arith.constant 0 : i32
    %c0_i32_1 = arith.constant 0 : i32
    return %c0_i32, %c0_i32_0 : i32, i32
  }
  func.func @transform_6(%arg0: i32, %arg1: i32) -> (i32, i32, i32) {
    %c0_i32 = arith.constant 0 : i32
    %c0_i32_0 = arith.constant 0 : i32
    %c0_i32_1 = arith.constant 0 : i32
    return %arg0, %c0_i32, %c0_i32_0 : i32, i32, i32
  }
  func.func @transform_7(%arg0: i32, %arg1: i32) -> (i32, i32, i32) {
    %c0_i32 = arith.constant 0 : i32
    %c0_i32_0 = arith.constant 0 : i32
    %c0_i32_1 = arith.constant 0 : i32
    return %arg0, %c0_i32, %c0_i32_0 : i32, i32, i32
  }
  func.func @transform_8(%arg0: i32, %arg1: i32) -> (i32, i32, i32, i32) {
    %c0_i32 = arith.constant 0 : i32
    %c0_i32_0 = arith.constant 0 : i32
    %c0_i32_1 = arith.constant 0 : i32
    return %arg0, %arg1, %c0_i32, %c0_i32_0 : i32, i32, i32, i32
  }
}

</mosaic_0001>

<llo_original>
// kernel: tpu_custom_call.1
$region0: #{tpu_custom_call.1}
  #allocation0 [shape = 'u32[]', space=smem, size = 0x4, offset = 0x4, fixed_abs, tag = 'smem constant byte address 0x4 - core index']
  #allocation1 [shape = 'u32[144,128]{1,0:T(1,128)}', space=vmem, size = 0x12000, scoped, tag = 'internal scratch']
  %s0 = inlined_call_operand.hbm [shape: bf16[2,8,32], index: 0, kind: input, shape index: {}]
  %s1 = inlined_call_operand.vmem [shape: bf16[1,32,64], index: 1, kind: input, shape index: {}]
  %s2 = inlined_call_operand.hbm [shape: f32[1,1,64], index: 2, kind: input, shape index: {}]
  %s3 = inlined_call_operand.hbm [shape: f32[2,1,8], index: 3, kind: input, shape index: {}]
  %s4 = inlined_call_operand.hbm [shape: f32[2,1,8], index: 4, kind: input, shape index: {}]
  %s5 = inlined_call_operand.vmem [shape: f32[8,8], index: 5, kind: input, shape index: {}]
  %s6 = inlined_call_operand.vmem [shape: f32[2,8,1], index: 6, kind: input, shape index: {}]
  %s7 = inlined_call_operand.vmem [shape: f32[2,1,8], index: 7, kind: input, shape index: {}]
  %s8 = inlined_call_operand.hbm [shape: f32[2,2,8,8], index: 8, kind: output, shape index: {}]
  %s9 = sld [smem:[#allocation0]]
  $region81: #{tpu_custom_call.1} parent=0
    _
  %s11 = ssub.s32 1, %s9
  %s12 = scalar_select 0, %s11, %s9
  $region1: #{tpu_custom_call.1} parent=0
    #allocation2 [shape = 'u8[4096]{0}', space=vmem, size = 0x1000, scoped, tag = 'input window, operand 0']
    #allocation3 [shape = 's32[2]{0}', space=sflag, size = 0x8, scoped, tag = 'scoped memory for tpu_custom_call.1']
    #allocation4 [shape = 's32[2]{0}', space=sflag, size = 0x8, scoped, tag = 'scoped memory for tpu_custom_call.1']
    #allocation5 [shape = 'u8[512]{0}', space=vmem, size = 0x400, scoped, tag = 'input window, operand 2, single buffered']
    #allocation6 [shape = 's32[1]{0}', space=sflag, size = 0x4, scoped, tag = 'scoped memory for tpu_custom_call.1']
    #allocation7 [shape = 'u8[1024]{0}', space=vmem, size = 0x400, scoped, tag = 'input window, operand 3, single buffered']
    #allocation8 [shape = 'u8[1024]{0}', space=vmem, size = 0x400, scoped, tag = 'input window, operand 4, single buffered']
    #allocation9 [shape = 's32[1]{0}', space=sflag, size = 0x4, scoped, tag = 'scoped memory for tpu_custom_call.1']
    #allocation10 [shape = 'u8[16384]{0}', space=vmem, size = 0x4000, scoped, tag = 'output window, operand 0']
    %13 = vsyncpa [#allocation3], 0
    %s14 = scalar_lea.sflag [#allocation3], 1
    %15 = vsyncpa %s14, 0
    %16 = vsyncpa [#allocation6], 0
    %17 = vsyncpa [#allocation9], 0
    %18 = vsyncpa [#allocation4], 0
    %s19 = scalar_lea.sflag [#allocation4], 1
    %20 = vsyncpa %s19, 0
    loop: start=0, step=1, limit=4
    $region2: #{tpu_custom_call.1} parent=1 // loop_pre_header
      _
    $region3: #{tpu_custom_call.1} parent=1 // loop_header
      %s22 = sphi 0, %s26
      %p23 = scmp.ge.s32.totalorder %s22, 4
      %s29 = sphi 0, %s41
      %s30 = sphi 0, %s37
      %s31 = sphi 0, %s29
      %s32 = sphi 0, %s30
      %s33 = sphi 0, %s31
      %s34 = sphi 0, %s32
      %s44 = sphi 0, %s46
      %s47 = sphi 0, %s44
      %s48 = sphi 0, %s47
      %s64 = sphi 0, %s48
      %s68 = sphi 0, %s68
      %s70 = sphi 0, %s68
      %s71 = sphi 0, %s70
      %s85 = sphi 0, %s71
      %s89 = sphi 0, %s89
      %s91 = sphi 0, %s89
      %s92 = sphi 0, %s91
      %s106 = sphi 0, %s92
      %s110 = sphi 0, %s110
      %s112 = sphi 0, %s110
      %s113 = sphi 0, %s112
      %s127 = sphi 0, %s113
      %s131 = sphi 0, %s131
      %s133 = sphi 0, %s131
      %s134 = sphi 0, %s133
      %s148 = sphi 0, %s134
      %s152 = sphi 0, %s152
      %s154 = sphi 0, %s152
      %s155 = sphi 0, %s154
      %s169 = sphi 0, %s155
      %s175 = sphi 0, %s177
      %s178 = sphi 0, %s175
      %s179 = sphi 0, %s178
      %s195 = sphi 0, %s179
      %s201 = sphi 0, %s203
      %s204 = sphi 0, %s201
      %s205 = sphi 0, %s204
      %s221 = sphi 0, %s205
      %s229 = sphi 0, %s231
      %s232 = sphi 0, %s229
      %s233 = sphi 0, %s232
      %s249 = sphi 0, %s233
    $region4: #{tpu_custom_call.1} parent=1 // loop_header_branch
      %25 = sbr.rel (%p23) target = $region8
    $region5: #{tpu_custom_call.1} parent=1 // loop_body
      %s27 = ssub.s32 %s22, 1
      %s28 = ssub.s32 %s22, 2
      %s35 = sadd.s32 1, %s30
      %p36 = scmp.ge.s32.totalorder %s35, 1
      %s37 = scalar_select %p36, 0, %s35
      %s38 = sadd.s32 1, %s29
      %s39 = scalar_select %p36, %s38, %s29
      %p40 = scmp.ge.s32.totalorder %s39, 2
      %s41 = scalar_select %p40, 0, %s39
      %s42 = ssub.s32 %s29, %s41
      %p43 = scmp.eq.s32.totalorder %s42, 0
      %s45 = sadd.s32 %s44, 1
      %s46 = scalar_select %p43, %s44, %s45
      %p49 = pneg %p43
      %p50 = scmp.eq.s32.totalorder %s22, 1
      %p51 = por %p49, %p50
      %p52 = scmp.ne.s32.totalorder %s44, %s47
      %p53 = scmp.eq.s32.totalorder %s22, 0
      %p54 = por %p52, %p53
      %p55 = scmp.ne.s32.totalorder %s44, %s47
      %p56 = scmp.eq.s32.totalorder %s27, 1
      %p57 = por %p55, %p56
      %p58 = scmp.ne.s32.totalorder %s47, %s48
      %p59 = scmp.eq.s32.totalorder %s27, 0
      %p60 = por %p58, %p59
      %p61 = scmp.ne.s32.totalorder %s47, %s48
      %p62 = scmp.eq.s32.totalorder %s28, 1
      %p63 = por %p61, %p62
      %p65 = scmp.ne.s32.totalorder %s48, %s64
      %p66 = scmp.eq.s32.totalorder %s28, 0
      %p67 = por %p65, %p66
      %s69 = sadd.s32 %s68, 1
      %p72 = scmp.eq.s32.totalorder %s22, 1
      %p73 = scmp.ne.s32.totalorder %s68, %s70
      %p74 = scmp.eq.s32.totalorder %s22, 0
      %p75 = por %p73, %p74
      %p76 = scmp.ne.s32.totalorder %s68, %s70
      %p77 = scmp.eq.s32.totalorder %s27, 1
      %p78 = por %p76, %p77
      %p79 = scmp.ne.s32.totalorder %s70, %s71
      %p80 = scmp.eq.s32.totalorder %s27, 0
      %p81 = por %p79, %p80
      %p82 = scmp.ne.s32.totalorder %s70, %s71
      %p83 = scmp.eq.s32.totalorder %s28, 1
      %p84 = por %p82, %p83
      %p86 = scmp.ne.s32.totalorder %s71, %s85
      %p87 = scmp.eq.s32.totalorder %s28, 0
      %p88 = por %p86, %p87
      %s90 = sadd.s32 %s89, 1
      %p93 = scmp.eq.s32.totalorder %s22, 1
      %p94 = scmp.ne.s32.totalorder %s89, %s91
      %p95 = scmp.eq.s32.totalorder %s22, 0
      %p96 = por %p94, %p95
      %p97 = scmp.ne.s32.totalorder %s89, %s91
      %p98 = scmp.eq.s32.totalorder %s27, 1
      %p99 = por %p97, %p98
      %p100 = scmp.ne.s32.totalorder %s91, %s92
      %p101 = scmp.eq.s32.totalorder %s27, 0
      %p102 = por %p100, %p101
      %p103 = scmp.ne.s32.totalorder %s91, %s92
      %p104 = scmp.eq.s32.totalorder %s28, 1
      %p105 = por %p103, %p104
      %p107 = scmp.ne.s32.totalorder %s92, %s106
      %p108 = scmp.eq.s32.totalorder %s28, 0
      %p109 = por %p107, %p108
      %s111 = sadd.s32 %s110, 1
      %p114 = scmp.eq.s32.totalorder %s22, 1
      %p115 = scmp.ne.s32.totalorder %s110, %s112
      %p116 = scmp.eq.s32.totalorder %s22, 0
      %p117 = por %p115, %p116
      %p118 = scmp.ne.s32.totalorder %s110, %s112
      %p119 = scmp.eq.s32.totalorder %s27, 1
      %p120 = por %p118, %p119
      %p121 = scmp.ne.s32.totalorder %s112, %s113
      %p122 = scmp.eq.s32.totalorder %s27, 0
      %p123 = por %p121, %p122
      %p124 = scmp.ne.s32.totalorder %s112, %s113
      %p125 = scmp.eq.s32.totalorder %s28, 1
      %p126 = por %p124, %p125
      %p128 = scmp.ne.s32.totalorder %s113, %s127
      %p129 = scmp.eq.s32.totalorder %s28, 0
      %p130 = por %p128, %p129
      %s132 = sadd.s32 %s131, 1
      %p135 = scmp.eq.s32.totalorder %s22, 1
      %p136 = scmp.ne.s32.totalorder %s131, %s133
      %p137 = scmp.eq.s32.totalorder %s22, 0
      %p138 = por %p136, %p137
      %p139 = scmp.ne.s32.totalorder %s131, %s133
      %p140 = scmp.eq.s32.totalorder %s27, 1
      %p141 = por %p139, %p140
      %p142 = scmp.ne.s32.totalorder %s133, %s134
      %p143 = scmp.eq.s32.totalorder %s27, 0
      %p144 = por %p142, %p143
      %p145 = scmp.ne.s32.totalorder %s133, %s134
      %p146 = scmp.eq.s32.totalorder %s28, 1
      %p147 = por %p145, %p146
      %p149 = scmp.ne.s32.totalorder %s134, %s148
      %p150 = scmp.eq.s32.totalorder %s28, 0
      %p151 = por %p149, %p150
      %s153 = sadd.s32 %s152, 1
      %p156 = scmp.eq.s32.totalorder %s22, 1
      %p157 = scmp.ne.s32.totalorder %s152, %s154
      %p158 = scmp.eq.s32.totalorder %s22, 0
      %p159 = por %p157, %p158
      %p160 = scmp.ne.s32.totalorder %s152, %s154
      %p161 = scmp.eq.s32.totalorder %s27, 1
      %p162 = por %p160, %p161
      %p163 = scmp.ne.s32.totalorder %s154, %s155
      %p164 = scmp.eq.s32.totalorder %s27, 0
      %p165 = por %p163, %p164
      %p166 = scmp.ne.s32.totalorder %s154, %s155
      %p167 = scmp.eq.s32.totalorder %s28, 1
      %p168 = por %p166, %p167
      %p170 = scmp.ne.s32.totalorder %s155, %s169
      %p171 = scmp.eq.s32.totalorder %s28, 0
      %p172 = por %p170, %p171
      %s173 = ssub.s32 %s29, %s41
      %p174 = scmp.eq.s32.totalorder %s173, 0
      %s176 = sadd.s32 %s175, 1
      %s177 = scalar_select %p174, %s175, %s176
      %p180 = pneg %p174
      %p181 = scmp.eq.s32.totalorder %s22, 1
      %p182 = por %p180, %p181
      %p183 = scmp.ne.s32.totalorder %s175, %s178
      %p184 = scmp.eq.s32.totalorder %s22, 0
      %p185 = por %p183, %p184
      %p186 = scmp.ne.s32.totalorder %s175, %s178
      %p187 = scmp.eq.s32.totalorder %s27, 1
      %p188 = por %p186, %p187
      %p189 = scmp.ne.s32.totalorder %s178, %s179
      %p190 = scmp.eq.s32.totalorder %s27, 0
      %p191 = por %p189, %p190
      %p192 = scmp.ne.s32.totalorder %s178, %s179
      %p193 = scmp.eq.s32.totalorder %s28, 1
      %p194 = por %p192, %p193
      %p196 = scmp.ne.s32.totalorder %s179, %s195
      %p197 = scmp.eq.s32.totalorder %s28, 0
      %p198 = por %p196, %p197
      %s199 = ssub.s32 %s29, %s41
      %p200 = scmp.eq.s32.totalorder %s199, 0
      %s202 = sadd.s32 %s201, 1
      %s203 = scalar_select %p200, %s201, %s202
      %p206 = pneg %p200
      %p207 = scmp.eq.s32.totalorder %s22, 1
      %p208 = por %p206, %p207
      %p209 = scmp.ne.s32.totalorder %s201, %s204
      %p210 = scmp.eq.s32.totalorder %s22, 0
      %p211 = por %p209, %p210
      %p212 = scmp.ne.s32.totalorder %s201, %s204
      %p213 = scmp.eq.s32.totalorder %s27, 1
      %p214 = por %p212, %p213
      %p215 = scmp.ne.s32.totalorder %s204, %s205
      %p216 = scmp.eq.s32.totalorder %s27, 0
      %p217 = por %p215, %p216
      %p218 = scmp.ne.s32.totalorder %s204, %s205
      %p219 = scmp.eq.s32.totalorder %s28, 1
      %p220 = por %p218, %p219
      %p222 = scmp.ne.s32.totalorder %s205, %s221
      %p223 = scmp.eq.s32.totalorder %s28, 0
      %p224 = por %p222, %p223
      %s225 = ssub.s32 %s29, %s41
      %s226 = ssub.s32 %s30, %s37
      %s227 = sor.u32 %s225, %s226
      %p228 = scmp.eq.s32.totalorder %s227, 0
      %s230 = sadd.s32 %s229, 1
      %s231 = scalar_select %p228, %s229, %s230
      %p234 = pneg %p228
      %p235 = scmp.eq.s32.totalorder %s22, 1
      %p236 = por %p234, %p235
      %p237 = scmp.ne.s32.totalorder %s229, %s232
      %p238 = scmp.eq.s32.totalorder %s22, 0
      %p239 = por %p237, %p238
      %p240 = scmp.ne.s32.totalorder %s229, %s232
      %p241 = scmp.eq.s32.totalorder %s27, 1
      %p242 = por %p240, %p241
      %p243 = scmp.ne.s32.totalorder %s232, %s233
      %p244 = scmp.eq.s32.totalorder %s27, 0
      %p245 = por %p243, %p244
      %p246 = scmp.ne.s32.totalorder %s232, %s233
      %p247 = scmp.eq.s32.totalorder %s28, 1
      %p248 = por %p246, %p247
      %p250 = scmp.ne.s32.totalorder %s233, %s249
      %p251 = scmp.eq.s32.totalorder %s28, 0
      %p252 = por %p250, %p251
      %p253 = scmp.le.s32.totalorder 1, %s22
      %p254 = scmp.lt.s32.totalorder %s22, 3
      %p255 = pnand %p253, %p254
      %p256 = pneg %p255
      // Predicated region
      $region9: #{tpu_custom_call.1} parent=5 // pred_check
        _
      $region10: #{tpu_custom_call.1} parent=5 // pred_check_branch
        %258 = sbr.rel (%p255) target = $region12
      $region11: #{tpu_custom_call.1} parent=5 // pred_region
        %s259 = ssub.s32 %s22, 1
        // Predicated region
        $region13: #{tpu_custom_call.1} parent=11 // pred_check
          %p260 = pneg %p81
        $region14: #{tpu_custom_call.1} parent=11 // pred_check_branch
          %262 = sbr.rel (%p260) target = $region16
        $region15: #{tpu_custom_call.1} parent=11 // pred_region
          _
        $region16: #{tpu_custom_call.1} parent=11 // pred_fallthru
          _
        // Predicated region
        $region17: #{tpu_custom_call.1} parent=11 // pred_check
          %p263 = pneg %p102
        $region18: #{tpu_custom_call.1} parent=11 // pred_check_branch
          %265 = sbr.rel (%p263) target = $region20
        $region19: #{tpu_custom_call.1} parent=11 // pred_region
          %s267 = ssub.s32 16, 16
          %268 = vsyncadd [#allocation6], %s267
          %s270 = sshll.u32 [#allocation5], 4
          %s271 = int_to_ptr.vmem [resolvable:$true] %s270
          %273 = dma.hbm_to_vmem [thread:$0]  %s2, 16, %s271, [#allocation6]
        $region20: #{tpu_custom_call.1} parent=11 // pred_fallthru
          _
        // Predicated region
        $region21: #{tpu_custom_call.1} parent=11 // pred_check
          %p274 = pneg %p123
        $region22: #{tpu_custom_call.1} parent=11 // pred_check_branch
          %276 = sbr.rel (%p274) target = $region24
        $region23: #{tpu_custom_call.1} parent=11 // pred_region
          %s278 = ssub.s32 32, 32
          %279 = vsyncadd [#allocation6], %s278
          %s280 = sshll.u32 [#allocation7], 4
          %s281 = int_to_ptr.vmem [resolvable:$true] %s280
          %286 = dma.hbm_to_vmem [thread:$0]  %s3, 32, %s281, [#allocation6], 16, 16, 1
        $region24: #{tpu_custom_call.1} parent=11 // pred_fallthru
          _
        // Predicated region
        $region25: #{tpu_custom_call.1} parent=11 // pred_check
          %p287 = pneg %p144
        $region26: #{tpu_custom_call.1} parent=11 // pred_check_branch
          %289 = sbr.rel (%p287) target = $region28
        $region27: #{tpu_custom_call.1} parent=11 // pred_region
          %s291 = ssub.s32 32, 32
          %292 = vsyncadd [#allocation9], %s291
          %s293 = sshll.u32 [#allocation8], 4
          %s294 = int_to_ptr.vmem [resolvable:$true] %s293
          %299 = dma.hbm_to_vmem [thread:$0]  %s4, 32, %s294, [#allocation9], 16, 16, 1
        $region28: #{tpu_custom_call.1} parent=11 // pred_fallthru
          _
        // Predicated region
        $region29: #{tpu_custom_call.1} parent=11 // pred_check
          %p300 = pneg %p165
        $region30: #{tpu_custom_call.1} parent=11 // pred_check_branch
          %302 = sbr.rel (%p300) target = $region32
        $region31: #{tpu_custom_call.1} parent=11 // pred_region
          _
        $region32: #{tpu_custom_call.1} parent=11 // pred_fallthru
          _
      $region12: #{tpu_custom_call.1} parent=5 // pred_fallthru
        _
      %p303 = scmp.lt.s32.totalorder %s22, 2
      // Predicated region
      $region33: #{tpu_custom_call.1} parent=5 // pred_check
        %p304 = pneg %p303
      $region34: #{tpu_custom_call.1} parent=5 // pred_check_branch
        %306 = sbr.rel (%p304) target = $region36
      $region35: #{tpu_custom_call.1} parent=5 // pred_region
        // Predicated region
        $region37: #{tpu_custom_call.1} parent=35 // pred_check
          %p307 = pneg %p54
        $region38: #{tpu_custom_call.1} parent=35 // pred_check_branch
          %309 = sbr.rel (%p307) target = $region40
        $region39: #{tpu_custom_call.1} parent=35 // pred_region
          %s310 = sand.u32 %s44, 1
          %s311 = scalar_lea.sflag [#allocation3], %s310
          %s312 = sand.u32 %s44, 1
          %s313 = smul.addr %s312, 4
          %s314 = scalar_lea.vmem [#allocation2], %s313
          %s316 = ssub.s32 64, 64
          %317 = vsyncadd %s311, %s316
          %s318 = smul.addr %s29, 64
          %s319 = scalar_lea.hbm %s0, %s318
          %s321 = sshll.u32 %s314, 4
          %s322 = int_to_ptr.vmem [resolvable:$true] %s321
          %324 = dma.hbm_to_vmem [thread:$0]  %s319, 64, %s322, %s311
        $region40: #{tpu_custom_call.1} parent=35 // pred_fallthru
          _
        // Predicated region
        $region41: #{tpu_custom_call.1} parent=35 // pred_check
          %p325 = pneg %p185
        $region42: #{tpu_custom_call.1} parent=35 // pred_check_branch
          %327 = sbr.rel (%p325) target = $region44
        $region43: #{tpu_custom_call.1} parent=35 // pred_region
          %p328 = scmp.lt.s32.totalorder %s29, 1
          %s329 = scalar_select %p328, %s29, 1
          %s330 = smul.addr %s329, 8
          %s331 = scalar_lea.vmem %s6, %s330
        $region44: #{tpu_custom_call.1} parent=35 // pred_fallthru
          _
        // Predicated region
        $region45: #{tpu_custom_call.1} parent=35 // pred_check
          %p332 = pneg %p211
        $region46: #{tpu_custom_call.1} parent=35 // pred_check_branch
          %334 = sbr.rel (%p332) target = $region48
        $region47: #{tpu_custom_call.1} parent=35 // pred_region
          %p335 = scmp.lt.s32.totalorder %s29, 1
          %s336 = scalar_select %p335, %s29, 1
          %s337 = scalar_lea.vmem %s7, %s336
        $region48: #{tpu_custom_call.1} parent=35 // pred_fallthru
          _
      $region36: #{tpu_custom_call.1} parent=5 // pred_fallthru
        _
      %p338 = scmp.le.s32.totalorder 1, %s22
      %p339 = scmp.lt.s32.totalorder %s22, 3
      %p340 = pnand %p338, %p339
      %p341 = pneg %p340
      // Predicated region
      $region49: #{tpu_custom_call.1} parent=5 // pred_check
        _
      $region50: #{tpu_custom_call.1} parent=5 // pred_check_branch
        %343 = sbr.rel (%p340) target = $region52
      $region51: #{tpu_custom_call.1} parent=5 // pred_region
        %s344 = ssub.s32 %s22, 1
        %s345 = sand.u32 %s47, 1
        %s346 = scalar_lea.sflag [#allocation3], %s345
        %s347 = sand.u32 %s47, 1
        %s348 = smul.addr %s347, 4
        %s349 = scalar_lea.vmem [#allocation2], %s348
        // Predicated region
        $region53: #{tpu_custom_call.1} parent=51 // pred_check
          %p350 = pneg %p60
        $region54: #{tpu_custom_call.1} parent=51 // pred_check_branch
          %352 = sbr.rel (%p350) target = $region56
        $region55: #{tpu_custom_call.1} parent=51 // pred_region
          %353 = dma.done %s346, 64
        $region56: #{tpu_custom_call.1} parent=51 // pred_fallthru
          _
        // Predicated region
        $region57: #{tpu_custom_call.1} parent=51 // pred_check
          %p354 = pneg %p102
        $region58: #{tpu_custom_call.1} parent=51 // pred_check_branch
          %356 = sbr.rel (%p354) target = $region60
        $region59: #{tpu_custom_call.1} parent=51 // pred_region
          %357 = dma.done [#allocation6], 16
        $region60: #{tpu_custom_call.1} parent=51 // pred_fallthru
          _
        // Predicated region
        $region61: #{tpu_custom_call.1} parent=51 // pred_check
          %p358 = pneg %p123
        $region62: #{tpu_custom_call.1} parent=51 // pred_check_branch
          %360 = sbr.rel (%p358) target = $region64
        $region63: #{tpu_custom_call.1} parent=51 // pred_region
          %361 = dma.done [#allocation6], 32
        $region64: #{tpu_custom_call.1} parent=51 // pred_fallthru
          _
        // Predicated region
        $region65: #{tpu_custom_call.1} parent=51 // pred_check
          %p362 = pneg %p144
        $region66: #{tpu_custom_call.1} parent=51 // pred_check_branch
          %364 = sbr.rel (%p362) target = $region68
        $region67: #{tpu_custom_call.1} parent=51 // pred_region
          %365 = dma.done [#allocation9], 32
        $region68: #{tpu_custom_call.1} parent=51 // pred_fallthru
          _
        %s366 = sand.u32 %s47, 1
        %s367 = scalar_lea.sflag [#allocation3], %s366
        %s368 = sand.u32 %s47, 1
        %s369 = smul.addr %s368, 4
        %s370 = scalar_lea.vmem [#allocation2], %s369
        %p371 = pneg %p60
        %p372 = pneg %p57
        %p373 = pneg %p81
        %p374 = pneg %p78
        %p375 = pneg %p102
        %p376 = pneg %p99
        %p377 = pneg %p123
        %p378 = pneg %p120
        %p379 = pneg %p144
        %p380 = pneg %p141
        %p381 = pneg %p165
        %p382 = pneg %p162
        %p383 = scmp.lt.s32.totalorder %s31, 1
        %s384 = scalar_select %p383, %s31, 1
        %s385 = smul.addr %s384, 8
        %s386 = scalar_lea.vmem %s6, %s385
        %p387 = pneg %p191
        %p388 = pneg %p188
        %p389 = scmp.lt.s32.totalorder %s31, 1
        %s390 = scalar_select %p389, %s31, 1
        %s391 = scalar_lea.vmem %s7, %s390
        %p392 = pneg %p217
        %p393 = pneg %p214
        %p394 = pneg %p245
        %p395 = pneg %p242
        %s396 = sand.u32 %s232, 1
        %s397 = scalar_lea.sflag [#allocation4], %s396
        %s398 = sand.u32 %s232, 1
        %s399 = smul.addr %s398, 16
        %s400 = scalar_lea.vmem [#allocation10], %s399
        %p401 = scmp.lt.s32.totalorder %s31, 1
        %s402 = scalar_select %p401, %s31, 1
        %s403 = smul.addr %s402, 8
        %s404 = scalar_lea.vmem %s6, %s403
        %p405 = scmp.lt.s32.totalorder %s31, 1
        %s406 = scalar_select %p405, %s31, 1
        %s407 = scalar_lea.vmem %s7, %s406
        %s408 = smul.u32 2, %s32
        %v410 = vld [vmem:[%s349] sm:$0xf]
        %s411 = smul.u32 %s32, 4
        %s412 = smul.addr %s411, 4
        %s413 = scalar_lea.vmem %s1, %s412
        %v414 = vld [vmem:[%s413] sm:$0xf]
        %v415 = vld [vmem:[%s413 + $0x4] sm:$0xf]
        %v416 = vld [vmem:[%s413 + $0x8] sm:$0xf]
        %v417 = vld [vmem:[%s413 + $0xc] sm:$0xf]
        %s418 = scalar_lea.vmem [#allocation5], %s32
        %v419 = vld [vmem:[%s418] sm:$0x1]
        %v421 = vlaneseq
        %v422 = vshrl.u32 %v421, 7
        %v423 = vsub.s32 0, %v422
        %v424 = vrot.slane %v419, %v423
        %v430 = vunpack.c.l.b16 %v414
        %v431 = vunpack.c.l.b16 %v415
        %v432 = vunpack.c.l.b16 %v416
        %v433 = vunpack.c.l.b16 %v417
        %v434 = vpack.c.b16 %v431, %v430
        %v435 = vpack.c.b16 %v433, %v432
        %vm438 = vcmask 261120
        %v440 = vsel %vm438, %v410, 0
        %442 = vmatprep.subr.bf16.mxu0 0
        %443 = vmatpush1.bf16.msra.mxu0 0
        %444 = vmatprep.subr.bf16.mxu0 0
        %445 = vmatpush1.bf16.msra.mxu0 0
        %446 = vmatprep.subr.bf16.mxu0 0
        %447 = vmatpush1.bf16.msra.mxu0 0
        %448 = vmatprep.subr.bf16.mxu0 0
        %449 = vmatpush1.bf16.msra.mxu0 0
        %450 = vmatprep.subr.bf16.mxu0 0
        %451 = vmatpush1.bf16.msra.mxu0 0
        %452 = vmatprep.subr.bf16.mxu0 0
        %453 = vmatpush1.bf16.msra.mxu0 0
        %454 = vmatprep.subr.bf16.mxu0 0
        %455 = vmatpush1.bf16.msra.mxu0 %v435
        %456 = vmatprep.subr.bf16.mxu0 0
        %457 = vmatpush1.bf16.msra.mxu0 %v434
        %458 = vmatprep.subr.bf16.mxu0 0
        %459 = vmatpush2.bf16.msra.mxu0 0
        %460 = vmatprep.subr.bf16.mxu0 0
        %461 = vmatpush2.bf16.msra.mxu0 0
        %462 = vmatprep.subr.bf16.mxu0 0
        %463 = vmatpush2.bf16.msra.mxu0 0
        %464 = vmatprep.subr.bf16.mxu0 0
        %465 = vmatpush2.bf16.msra.mxu0 0
        %466 = vmatprep.subr.bf16.mxu0 0
        %467 = vmatpush2.bf16.msra.mxu0 0
        %468 = vmatprep.subr.bf16.mxu0 0
        %469 = vmatpush2.bf16.msra.mxu0 0
        %470 = vmatprep.subr.bf16.mxu0 0
        %471 = vmatpush2.bf16.msra.mxu0 0
        %472 = vmatprep.subr.bf16.mxu0 0
        %473 = vmatpush2.bf16.msra.mxu0 0
        %474 = vmatprep.mubr.bf16.mxu0 0
        %475 = vmatmul.mubr.bf16.gmra.mxu0 %v440
        %v476 = vpop.f32.mrf.mxu0
        %v477 = vadd.f32 %v424, %v476
        %v478 = vpop.f32.mrf.mxu0
        %v479 = vpop.f32.mrf.mxu0
        %v480 = vpop.f32.mrf.mxu0
        %481 = vdwg.mxu0
        %v482 = vld [vmem:[%s5] sm:$0xff]
        %v483 = vld [vmem:[%s404] sm:$0xff]
        %v484 = vld [vmem:[%s407] sm:$0x1]
        %s485 = smul.u32 %s32, 2
        %s486 = scalar_lea.vmem [#allocation7], %s485
        %v487 = vld [vmem:[%s486] sm:$0x1]
        %s488 = scalar_lea.vmem [#allocation8], %s485
        %v489 = vld [vmem:[%s488] sm:$0x1]
        %v491 = vlaneseq
        %v492 = vshrl.u32 %v491, 7
        %v493 = vsub.s32 0, %v492
        %v494 = vrot.slane %v487, %v493
        %v496 = vmul.f32 %v477, %v494
        %v498 = vlaneseq
        %v499 = vshrl.u32 %v498, 7
        %v500 = vsub.s32 0, %v499
        %v501 = vrot.slane %v489, %v500
        %503 = vrot.lane.b32.xlu0 %v501, 8
        %v504 = vpop.permute.xlu0 %503
        %v506 = vmul.f32 %v477, %v504
        %508 = vrot.lane.b32.xlu0 %v506, 120
        %v509 = vpop.permute.xlu0 %508
        %v511 = vsub.f32 %v496, %v509
        %512 = vrot.lane.b32.xlu0 %v494, 8
        %v513 = vpop.permute.xlu0 %512
        %v515 = vmul.f32 %v477, %v513
        %v516 = vmul.f32 %v477, %v501
        %518 = vrot.lane.b32.xlu0 %v516, 8
        %v519 = vpop.permute.xlu0 %518
        %v521 = vadd.f32 %v515, %v519
        %vm522 = vcmask 64512
        %v523 = vsel %vm522, %v511, %v521
        %524 = vrot.lane.b32.xlu0 %v494, 16
        %v525 = vpop.permute.xlu0 %524
        %v527 = vmul.f32 %v477, %v525
        %528 = vrot.lane.b32.xlu0 %v501, 24
        %v529 = vpop.permute.xlu0 %528
        %v531 = vmul.f32 %v477, %v529
        %533 = vrot.lane.b32.xlu0 %v531, 120
        %v534 = vpop.permute.xlu0 %533
        %v536 = vsub.f32 %v527, %v534
        %537 = vrot.lane.b32.xlu0 %v494, 24
        %v538 = vpop.permute.xlu0 %537
        %v540 = vmul.f32 %v477, %v538
        %541 = vrot.lane.b32.xlu0 %v501, 16
        %v542 = vpop.permute.xlu0 %541
        %v544 = vmul.f32 %v477, %v542
        %546 = vrot.lane.b32.xlu0 %v544, 8
        %v547 = vpop.permute.xlu0 %546
        %v549 = vadd.f32 %v540, %v547
        %551 = vrot.lane.b32.xlu0 %v536, 112
        %v552 = vpop.permute.xlu0 %551
        %555 = vrot.lane.b32.xlu0 %v549, 112
        %v556 = vpop.permute.xlu0 %555
        %v558 = vsel %vm522, %v552, %v556
        %v559 = vpack.c.bf16 %v523, %v523
        %v560 = vpack.c.bf16 %v558, %v558
        %vm561 = vcmask 130048
        %v563 = vsel %vm561, %v559, 0
        %v566 = vsel %vm561, %v560, 0
        %568 = vmatprep.subr.bf16.mxu0 0
        %569 = vmatpush1.bf16.xpose.msra.mxu0 0
        %570 = vmatprep.subr.bf16.mxu0 0
        %571 = vmatpush1.bf16.xpose.msra.mxu0 0
        %572 = vmatprep.subr.bf16.mxu0 0
        %573 = vmatpush1.bf16.xpose.msra.mxu0 0
        %574 = vmatprep.subr.bf16.mxu0 0
        %575 = vmatpush1.bf16.xpose.msra.mxu0 0
        %576 = vmatprep.subr.bf16.mxu0 0
        %577 = vmatpush1.bf16.xpose.msra.mxu0 0
        %578 = vmatprep.subr.bf16.mxu0 0
        %579 = vmatpush1.bf16.xpose.msra.mxu0 0
        %580 = vmatprep.subr.bf16.mxu0 0
        %581 = vmatpush1.bf16.xpose.msra.mxu0 0
        %582 = vmatprep.subr.bf16.mxu0 0
        %583 = vmatpush1.bf16.xpose.msra.mxu0 %v566
        %584 = vmatprep.subr.bf16.mxu0 0
        %585 = vmatpush2.bf16.xpose.msra.mxu0 0
        %586 = vmatprep.subr.bf16.mxu0 0
        %587 = vmatpush2.bf16.xpose.msra.mxu0 0
        %588 = vmatprep.subr.bf16.mxu0 0
        %589 = vmatpush2.bf16.xpose.msra.mxu0 0
        %590 = vmatprep.subr.bf16.mxu0 0
        %591 = vmatpush2.bf16.xpose.msra.mxu0 0
        %592 = vmatprep.subr.bf16.mxu0 0
        %593 = vmatpush2.bf16.xpose.msra.mxu0 0
        %594 = vmatprep.subr.bf16.mxu0 0
        %595 = vmatpush2.bf16.xpose.msra.mxu0 0
        %596 = vmatprep.subr.bf16.mxu0 0
        %597 = vmatpush2.bf16.xpose.msra.mxu0 0
        %598 = vmatprep.subr.bf16.mxu0 0
        %599 = vmatpush2.bf16.xpose.msra.mxu0 0
        %600 = vmatprep.mubr.bf16.mxu0 0
        %601 = vmatmul.mubr.bf16.gmra.mxu0 %v563
        %v602 = vpop.f32.mrf.mxu0
        %v603 = vadd.f32 %v482, %v602
        %v604 = vpop.f32.mrf.mxu0
        %v605 = vpop.f32.mrf.mxu0
        %v606 = vpop.f32.mrf.mxu0
        %607 = vdwg.mxu0
        %609 = vset.pattern.permute.xlu0 0
        %610 = vperm.xlu0 %609, %v483
        %v611 = vpop.permute.xlu0 %610
        %v613 = vadd.f32 %v603, %v611
        %v615 = vlaneseq
        %v616 = vshrl.u32 %v615, 7
        %v617 = vsub.s32 0, %v616
        %v618 = vrot.slane %v484, %v617
        %v620 = vadd.f32 %v613, %v618
        %621 = vst.msk [vmem:[%s400] sm:$0xff] %vm522, %v620
        %s622 = sadd.s32 %s485, 1
        %s623 = scalar_lea.vmem [#allocation7], %s622
        %v624 = vld [vmem:[%s623] sm:$0x1]
        %s625 = scalar_lea.vmem [#allocation8], %s622
        %v626 = vld [vmem:[%s625] sm:$0x1]
        %v628 = vlaneseq
        %v629 = vshrl.u32 %v628, 7
        %v630 = vsub.s32 0, %v629
        %v631 = vrot.slane %v624, %v630
        %632 = vrot.lane.b32.xlu0 %v631, 32
        %v633 = vpop.permute.xlu0 %632
        %v635 = vmul.f32 %v477, %v633
        %v637 = vlaneseq
        %v638 = vshrl.u32 %v637, 7
        %v639 = vsub.s32 0, %v638
        %v640 = vrot.slane %v626, %v639
        %641 = vrot.lane.b32.xlu0 %v640, 40
        %v642 = vpop.permute.xlu0 %641
        %v644 = vmul.f32 %v477, %v642
        %646 = vrot.lane.b32.xlu0 %v644, 120
        %v647 = vpop.permute.xlu0 %646
        %v649 = vsub.f32 %v635, %v647
        %650 = vrot.lane.b32.xlu0 %v631, 40
        %v651 = vpop.permute.xlu0 %650
        %v653 = vmul.f32 %v477, %v651
        %654 = vrot.lane.b32.xlu0 %v640, 32
        %v655 = vpop.permute.xlu0 %654
        %v657 = vmul.f32 %v477, %v655
        %659 = vrot.lane.b32.xlu0 %v657, 8
        %v660 = vpop.permute.xlu0 %659
        %v662 = vadd.f32 %v653, %v660
        %664 = vrot.lane.b32.xlu0 %v649, 96
        %v665 = vpop.permute.xlu0 %664
        %668 = vrot.lane.b32.xlu0 %v662, 96
        %v669 = vpop.permute.xlu0 %668
        %v671 = vsel %vm522, %v665, %v669
        %672 = vrot.lane.b32.xlu0 %v631, 48
        %v673 = vpop.permute.xlu0 %672
        %v675 = vmul.f32 %v477, %v673
        %676 = vrot.lane.b32.xlu0 %v640, 56
        %v677 = vpop.permute.xlu0 %676
        %v679 = vmul.f32 %v477, %v677
        %681 = vrot.lane.b32.xlu0 %v679, 120
        %v682 = vpop.permute.xlu0 %681
        %v684 = vsub.f32 %v675, %v682
        %685 = vrot.lane.b32.xlu0 %v631, 56
        %v686 = vpop.permute.xlu0 %685
        %v688 = vmul.f32 %v477, %v686
        %689 = vrot.lane.b32.xlu0 %v640, 48
        %v690 = vpop.permute.xlu0 %689
        %v692 = vmul.f32 %v477, %v690
        %694 = vrot.lane.b32.xlu0 %v692, 8
        %v695 = vpop.permute.xlu0 %694
        %v697 = vadd.f32 %v688, %v695
        %699 = vrot.lane.b32.xlu0 %v684, 80
        %v700 = vpop.permute.xlu0 %699
        %703 = vrot.lane.b32.xlu0 %v697, 80
        %v704 = vpop.permute.xlu0 %703
        %v706 = vsel %vm522, %v700, %v704
        %v707 = vpack.c.bf16 %v671, %v671
        %v708 = vpack.c.bf16 %v706, %v706
        %v710 = vsel %vm561, %v707, 0
        %v713 = vsel %vm561, %v708, 0
        %715 = vmatprep.subr.bf16.mxu0 0
        %716 = vmatpush1.bf16.xpose.msra.mxu0 0
        %717 = vmatprep.subr.bf16.mxu0 0
        %718 = vmatpush1.bf16.xpose.msra.mxu0 0
        %719 = vmatprep.subr.bf16.mxu0 0
        %720 = vmatpush1.bf16.xpose.msra.mxu0 0
        %721 = vmatprep.subr.bf16.mxu0 0
        %722 = vmatpush1.bf16.xpose.msra.mxu0 0
        %723 = vmatprep.subr.bf16.mxu0 0
        %724 = vmatpush1.bf16.xpose.msra.mxu0 0
        %725 = vmatprep.subr.bf16.mxu0 0
        %726 = vmatpush1.bf16.xpose.msra.mxu0 0
        %727 = vmatprep.subr.bf16.mxu0 0
        %728 = vmatpush1.bf16.xpose.msra.mxu0 0
        %729 = vmatprep.subr.bf16.mxu0 0
        %730 = vmatpush1.bf16.xpose.msra.mxu0 %v713
        %731 = vmatprep.subr.bf16.mxu0 0
        %732 = vmatpush2.bf16.xpose.msra.mxu0 0
        %733 = vmatprep.subr.bf16.mxu0 0
        %734 = vmatpush2.bf16.xpose.msra.mxu0 0
        %735 = vmatprep.subr.bf16.mxu0 0
        %736 = vmatpush2.bf16.xpose.msra.mxu0 0
        %737 = vmatprep.subr.bf16.mxu0 0
        %738 = vmatpush2.bf16.xpose.msra.mxu0 0
        %739 = vmatprep.subr.bf16.mxu0 0
        %740 = vmatpush2.bf16.xpose.msra.mxu0 0
        %741 = vmatprep.subr.bf16.mxu0 0
        %742 = vmatpush2.bf16.xpose.msra.mxu0 0
        %743 = vmatprep.subr.bf16.mxu0 0
        %744 = vmatpush2.bf16.xpose.msra.mxu0 0
        %745 = vmatprep.subr.bf16.mxu0 0
        %746 = vmatpush2.bf16.xpose.msra.mxu0 0
        %747 = vmatprep.mubr.bf16.mxu0 0
        %748 = vmatmul.mubr.bf16.gmra.mxu0 %v710
        %v749 = vpop.f32.mrf.mxu0
        %v750 = vadd.f32 %v482, %v749
        %v751 = vpop.f32.mrf.mxu0
        %v752 = vpop.f32.mrf.mxu0
        %v753 = vpop.f32.mrf.mxu0
        %754 = vdwg.mxu0
        %v755 = vadd.f32 %v750, %v611
        %v756 = vadd.f32 %v755, %v618
        %s757 = scalar_lea.vmem %s400, 8 [#allocation10]
        %758 = vst.msk [vmem:[%s757] sm:$0xff] %vm522, %v756
        %s759 = sand.u32 %s232, 1
        %s760 = scalar_lea.sflag [#allocation4], %s759
        %s761 = sand.u32 %s232, 1
        %s762 = smul.addr %s761, 16
        %s763 = scalar_lea.vmem [#allocation10], %s762
        // Predicated region
        $region69: #{tpu_custom_call.1} parent=51 // pred_check
          %p764 = pneg %p242
        $region70: #{tpu_custom_call.1} parent=51 // pred_check_branch
          %766 = sbr.rel (%p764) target = $region72
        $region71: #{tpu_custom_call.1} parent=51 // pred_region
          %s767 = smul.u32 2, %s32
          %s769 = ssub.s32 256, 256
          %770 = vsyncadd %s760, %s769
          %s771 = smul.addr %s31, 2
          %s772 = sadd.s32 %s767, %s771
          %s773 = smul.addr %s772, 128
          %s774 = scalar_lea.hbm %s8, %s773
          %s775 = sshll.u32 %s763, 4
          %s776 = int_to_ptr.vmem [resolvable:$true] %s775
          %781 = dma.vmem_to_hbm [thread:$0]  %s776, 256, %s774, %s760, 128, 128, 8
        $region72: #{tpu_custom_call.1} parent=51 // pred_fallthru
          _
      $region52: #{tpu_custom_call.1} parent=5 // pred_fallthru
        _
      %p782 = scmp.le.s32.totalorder 2, %s22
      // Predicated region
      $region73: #{tpu_custom_call.1} parent=5 // pred_check
        %p783 = pneg %p782
      $region74: #{tpu_custom_call.1} parent=5 // pred_check_branch
        %785 = sbr.rel (%p783) target = $region76
      $region75: #{tpu_custom_call.1} parent=5 // pred_region
        %s786 = ssub.s32 %s22, 2
        // Predicated region
        $region77: #{tpu_custom_call.1} parent=75 // pred_check
          %p787 = pneg %p248
        $region78: #{tpu_custom_call.1} parent=75 // pred_check_branch
          %789 = sbr.rel (%p787) target = $region80
        $region79: #{tpu_custom_call.1} parent=75 // pred_region
          %s790 = sand.u32 %s233, 1
          %s791 = scalar_lea.sflag [#allocation4], %s790
          %s792 = sand.u32 %s233, 1
          %s793 = smul.addr %s792, 16
          %s794 = scalar_lea.vmem [#allocation10], %s793
          %795 = dma.done %s791, 256
        $region80: #{tpu_custom_call.1} parent=75 // pred_fallthru
          _
      $region76: #{tpu_custom_call.1} parent=5 // pred_fallthru
        _
    $region6: #{tpu_custom_call.1} parent=1 // loop_footer
      %s26 = sadd.s32 1, %s22
    $region7: #{tpu_custom_call.1} parent=1 // loop_footer_branch
      %21 = sbr.rel target = $region3
    $region8: #{tpu_custom_call.1} parent=1 // loop_exit
      _
    %796 = vsyncpa [#allocation3], 1
    %s797 = scalar_lea.sflag [#allocation3], 1
    %798 = vsyncpa %s797, 1
    %799 = vsyncpa [#allocation6], 1
    %800 = vsyncpa [#allocation9], 1
    %801 = vsyncpa [#allocation4], 1
    %s802 = scalar_lea.sflag [#allocation4], 1
    %803 = vsyncpa %s802, 1

</llo_original>
